<compile_context>
chip_gen: v6e
topology: v6e:2x2x1
jax: 0.10.0
libtpu: 0.0.40
codegen_flags: <defaults>
</compile_context>

<pallas_src>
import jax
import jax.numpy as jnp
from jax.experimental import pallas as pl
from jax.experimental.pallas import tpu as pltpu


def _multibranch_kernel(x_ref, wblk_ref, w1_ref, vec_ref, o_ref):
    # Block-diagonal branch weights (branch biases folded in via a ones column
    # of x): one matmul produces the concatenated pre-BN branch activations.
    h = jnp.dot(x_ref[...], wblk_ref[...], preferred_element_type=jnp.float32)
    h = jnp.maximum(h, 0.0)                                   # (B, 3H) ReLU

    # Head Linear. Eval-mode BN scale/shift is already folded into w1 / b1.
    z = jnp.dot(h, w1_ref[...], preferred_element_type=jnp.float32)
    z = z + vec_ref[0:1, :]                                   # + fused b1
    z = jnp.maximum(z, 0.0)                                   # ReLU; Dropout = identity (eval)

    # Final Linear(head -> 1) as VPU broadcast-multiply + lane reduction.
    out = jnp.sum(z * vec_ref[1:2, :], axis=-1, keepdims=True) + vec_ref[2:3, 0:1]
    o_ref[...] = out.astype(o_ref.dtype)


def multibranch_forward(x_lc, x_gc, x_tr, packed):
    B = x_lc.shape[0]
    k_pad = packed["w_blk"].shape[0]
    k_real = x_lc.shape[1] + x_gc.shape[1] + x_tr.shape[1]

    # Concatenate branch inputs, append a ones column (carries the branch
    # biases through the block-diagonal weight), zero-pad K to k_pad.
    ones = jnp.ones((B, 1), jnp.float32)
    pad = jnp.zeros((B, k_pad - k_real - 1), jnp.float32)
    x_aug = jnp.concatenate(
        [x_lc.astype(jnp.float32), x_gc.astype(jnp.float32),
         x_tr.astype(jnp.float32), ones, pad], axis=1)        # (B, k_pad)

    vmem = pl.BlockSpec(memory_space=pltpu.MemorySpace.VMEM)
    return pl.pallas_call(
        _multibranch_kernel,
        out_shape=jax.ShapeDtypeStruct((B, 1), jnp.float32),
        in_specs=[vmem, vmem, vmem, vmem],
        out_specs=vmem,
    )(x_aug, packed["w_blk"], packed["w1f"], packed["vec"])


def init_params(key, input_sizes, hidden_size=32, head_hidden=128,
                output_size=1, eps=1e-5):
    """Raw (PyTorch-style) parameters; BN stats folded to scale/shift."""
    lc, gc, tr = input_sizes
    keys = jax.random.split(key, 32)
    k = iter(keys)

    def lin(kw, kb, fan_in, fan_out):
        bound = 1.0 / jnp.sqrt(fan_in)
        w = jax.random.uniform(kw, (fan_in, fan_out), jnp.float32, -bound, bound)
        b = jax.random.uniform(kb, (1, fan_out), jnp.float32, -bound, bound)
        return w, b

    def bn(kg, kb, km, kv, n):
        gamma = 1.0 + 0.1 * jax.random.normal(kg, (1, n), jnp.float32)
        beta = 0.1 * jax.random.normal(kb, (1, n), jnp.float32)
        run_m = 0.1 * jax.random.normal(km, (1, n), jnp.float32)
        run_v = 1.0 + 0.1 * jax.random.uniform(kv, (1, n), jnp.float32)
        scale = gamma / jnp.sqrt(run_v + eps)
        shift = beta - run_m * scale
        return scale, shift

    p = {}
    p["w_lc"], p["b_lc"] = lin(next(k), next(k), lc, hidden_size)
    p["s_lc"], p["t_lc"] = bn(next(k), next(k), next(k), next(k), hidden_size)
    p["w_gc"], p["b_gc"] = lin(next(k), next(k), gc, hidden_size)
    p["s_gc"], p["t_gc"] = bn(next(k), next(k), next(k), next(k), hidden_size)
    p["w_tr"], p["b_tr"] = lin(next(k), next(k), tr, hidden_size)
    p["s_tr"], p["t_tr"] = bn(next(k), next(k), next(k), next(k), hidden_size)
    p["w1"], p["b1"] = lin(next(k), next(k), 3 * hidden_size, head_hidden)
    p["w2"], p["b2"] = lin(next(k), next(k), head_hidden, output_size)
    return p


def pack_params(p, input_sizes, hidden_size, k_pad=64):
    """Fold BN into the head and pack everything into 3 kernel arrays."""
    lc, gc, tr = input_sizes
    H = hidden_size
    head = p["b1"].shape[1]
    assert p["w2"].shape[1] == 1, "VPU-reduce head assumes output_size == 1"
    assert lc + gc + tr + 1 <= k_pad

    # Block-diagonal branch weight; last used row carries the concat'd biases
    # (paired with the ones column appended to x in the wrapper).
    w_blk = jnp.zeros((k_pad, 3 * H), jnp.float32)
    w_blk = w_blk.at[0:lc, 0:H].set(p["w_lc"])
    w_blk = w_blk.at[lc:lc + gc, H:2 * H].set(p["w_gc"])
    w_blk = w_blk.at[lc + gc:lc + gc + tr, 2 * H:3 * H].set(p["w_tr"])
    b_cat = jnp.concatenate([p["b_lc"], p["b_gc"], p["b_tr"]], axis=1)
    w_blk = w_blk.at[lc + gc + tr, :].set(b_cat[0])

    # Fold eval-mode BN: (h*s + t) @ w1 + b1 == h @ (s^T * w1) + (t @ w1 + b1)
    s_cat = jnp.concatenate([p["s_lc"], p["s_gc"], p["s_tr"]], axis=1)  # (1,3H)
    t_cat = jnp.concatenate([p["t_lc"], p["t_gc"], p["t_tr"]], axis=1)  # (1,3H)
    w1f = p["w1"] * s_cat.T                                             # (3H,head)
    b1f = p["b1"] + t_cat @ p["w1"]                                     # (1,head)

    # Vector slab: row0 = fused b1, row1 = w2 row, row2[0] = b2.
    vec = jnp.zeros((3, head), jnp.float32)
    vec = vec.at[0, :].set(b1f[0])
    vec = vec.at[1, :].set(p["w2"][:, 0])
    vec = vec.at[2, 0].set(p["b2"][0, 0])
    return {"w_blk": w_blk, "w1f": w1f, "vec": vec}


def reference_forward(x_lc, x_gc, x_tr, p):
    def branch(x, w, b, s, t):
        h = jnp.maximum(x @ w + b, 0.0)
        return h * s + t

    h_lc = branch(x_lc, p["w_lc"], p["b_lc"], p["s_lc"], p["t_lc"])
    h_gc = branch(x_gc, p["w_gc"], p["b_gc"], p["s_gc"], p["t_gc"])
    h_tr = branch(x_tr, p["w_tr"], p["b_tr"], p["s_tr"], p["t_tr"])
    merged = jnp.concatenate([h_lc, h_gc, h_tr], axis=1)
    z = jnp.maximum(merged @ p["w1"] + p["b1"], 0.0)
    return z @ p["w2"] + p["b2"]


if __name__ == "__main__":
    key = jax.random.PRNGKey(0)
    k_in, k_p = jax.random.split(key)

    batch = 8
    input_sizes = (24, 16, 12)     # (lc_size, gc_size, trans_size)
    hidden_size = 32
    head_hidden = 128
    output_size = 1

    k1, k2, k3 = jax.random.split(k_in, 3)
    x_lc = jax.random.normal(k1, (batch, input_sizes[0]), jnp.float32)
    x_gc = jax.random.normal(k2, (batch, input_sizes[1]), jnp.float32)
    x_tr = jax.random.normal(k3, (batch, input_sizes[2]), jnp.float32)

    params = init_params(k_p, input_sizes, hidden_size=hidden_size,
                         head_hidden=head_hidden, output_size=output_size)
    packed = pack_params(params, input_sizes, hidden_size, k_pad=64)

    out = multibranch_forward(x_lc, x_gc, x_tr, packed)
    out = jax.block_until_ready(out)

    ref = reference_forward(x_lc, x_gc, x_tr, params)
    assert out.shape == (batch, output_size)
    assert jnp.allclose(out, ref, atol=1e-4, rtol=1e-4), (out, ref)

    print("KERNEL_OK")
</pallas_src>

<mosaic_0001>
module attributes {stable_mosaic.version = 11 : i64} {
  func.func @_multibranch_kernel(%arg0: memref<8x64xf32, #tpu.memory_space<vmem>>, %arg1: memref<64x96xf32, #tpu.memory_space<vmem>>, %arg2: memref<96x128xf32, #tpu.memory_space<vmem>>, %arg3: memref<3x128xf32, #tpu.memory_space<vmem>>, %arg4: memref<8x1xf32, #tpu.memory_space<vmem>>) attributes {dimension_semantics = [], scalar_prefetch = 0 : i64, scratch_operands = 0 : i64, tpu.core_type = #tpu.core_type<tc>} {
    %c0 = arith.constant 0 : index
    %c0_0 = arith.constant 0 : index
    %0 = vector.load %arg0[%c0, %c0_0] : memref<8x64xf32, #tpu.memory_space<vmem>>, vector<8x64xf32>
    %c0_1 = arith.constant 0 : index
    %c0_2 = arith.constant 0 : index
    %1 = vector.load %arg1[%c0_1, %c0_2] : memref<64x96xf32, #tpu.memory_space<vmem>>, vector<64x96xf32>
    %cst = arith.constant dense<0.000000e+00> : vector<8x96xf32>
    %2 = tpu.matmul %0, %1, %cst {dimension_numbers = #tpu.dot_dimension_numbers<[1], [0], [0], [1], [0, 0, 1, 1], [], []>} : vector<8x64xf32>, vector<64x96xf32>, vector<8x96xf32> -> vector<8x96xf32>
    %cst_3 = arith.constant 0.000000e+00 : f32
    %3 = vector.broadcast %cst_3 : f32 to vector<8x96xf32>
    %4 = arith.maximumf %2, %3 : vector<8x96xf32>
    %c0_4 = arith.constant 0 : index
    %c0_5 = arith.constant 0 : index
    %5 = vector.load %arg2[%c0_4, %c0_5] : memref<96x128xf32, #tpu.memory_space<vmem>>, vector<96x128xf32>
    %cst_6 = arith.constant dense<0.000000e+00> : vector<8x128xf32>
    %6 = tpu.matmul %4, %5, %cst_6 {dimension_numbers = #tpu.dot_dimension_numbers<[1], [0], [0], [1], [0, 0, 1, 1], [], []>} : vector<8x96xf32>, vector<96x128xf32>, vector<8x128xf32> -> vector<8x128xf32>
    %c0_7 = arith.constant 0 : index
    %c0_8 = arith.constant 0 : index
    %7 = vector.load %arg3[%c0_7, %c0_8] : memref<3x128xf32, #tpu.memory_space<vmem>>, vector<1x128xf32>
    %8 = vector.broadcast %7 : vector<1x128xf32> to vector<8x128xf32>
    %9 = arith.addf %6, %8 : vector<8x128xf32>
    %cst_9 = arith.constant 0.000000e+00 : f32
    %10 = vector.broadcast %cst_9 : f32 to vector<8x128xf32>
    %11 = arith.maximumf %9, %10 : vector<8x128xf32>
    %c1 = arith.constant 1 : index
    %c0_10 = arith.constant 0 : index
    %12 = vector.load %arg3[%c1, %c0_10] : memref<3x128xf32, #tpu.memory_space<vmem>>, vector<1x128xf32>
    %13 = vector.broadcast %12 : vector<1x128xf32> to vector<8x128xf32>
    %14 = arith.mulf %11, %13 : vector<8x128xf32>
    %cst_11 = arith.constant dense<0.000000e+00> : vector<8xf32>
    %15 = vector.multi_reduction <add>, %14, %cst_11 [1] : vector<8x128xf32> to vector<8xf32>
    %16 = vector.shape_cast %15 : vector<8xf32> to vector<8x1xf32>
    %c2 = arith.constant 2 : index
    %c0_12 = arith.constant 0 : index
    %17 = vector.load %arg3[%c2, %c0_12] : memref<3x128xf32, #tpu.memory_space<vmem>>, vector<1x1xf32>
    %18 = vector.broadcast %17 : vector<1x1xf32> to vector<8x1xf32>
    %19 = arith.addf %16, %18 : vector<8x1xf32>
    %c0_13 = arith.constant 0 : index
    %c0_14 = arith.constant 0 : index
    %20 = vector.load %arg4[%c0_13, %c0_14] : memref<8x1xf32, #tpu.memory_space<vmem>>, vector<8x1xf32>
    tpu.vector_store %arg4[%c0_13, %c0_14], %19 {strides = array<i32>} : memref<8x1xf32, #tpu.memory_space<vmem>>, vector<8x1xf32>,
    return
  }
}

</mosaic_0001>

<llo_original>
// kernel: tpu_custom_call.1
$region0: #{tpu_custom_call.1}
  #allocation0 [shape = 'u32[]', space=smem, size = 0x4, offset = 0x4, fixed_abs, tag = 'smem constant byte address 0x4 - core index']
  #allocation1 [shape = 'u32[144,128]{1,0:T(1,128)}', space=vmem, size = 0x12000, scoped, tag = 'internal scratch']
  %s0 = inlined_call_operand.hbm [shape: f32[8,64], index: 0, kind: input, shape index: {}]
  %s1 = inlined_call_operand.hbm [shape: f32[64,96], index: 1, kind: input, shape index: {}]
  %s2 = inlined_call_operand.hbm [shape: f32[96,128], index: 2, kind: input, shape index: {}]
  %s3 = inlined_call_operand.vmem [shape: f32[3,128], index: 3, kind: input, shape index: {}]
  %s4 = inlined_call_operand.vmem [shape: f32[8,1], index: 4, kind: output, shape index: {}]
  %s5 = sld [smem:[#allocation0]]
  $region38: #{tpu_custom_call.1} parent=0
    _
  %s7 = ssub.s32 1, %s5
  %s8 = scalar_select 0, %s7, %s5
  $region1: #{tpu_custom_call.1} parent=0
    #allocation2 [shape = 'u8[4096]{0}', space=vmem, size = 0x1000, scoped, tag = 'input window, operand 0, single buffered']
    #allocation3 [shape = 's32[1]{0}', space=sflag, size = 0x4, scoped, tag = 'scoped memory for tpu_custom_call.1']
    #allocation4 [shape = 'u8[32768]{0}', space=vmem, size = 0x8000, scoped, tag = 'input window, operand 1, single buffered']
    #allocation5 [shape = 's32[1]{0}', space=sflag, size = 0x4, scoped, tag = 'scoped memory for tpu_custom_call.1']
    #allocation6 [shape = 'u8[49152]{0}', space=vmem, size = 0xc000, scoped, tag = 'input window, operand 2, single buffered']
    %9 = vsyncpa [#allocation3], 0
    %10 = vsyncpa [#allocation5], 0
    // Predicated region
    $region2: #{tpu_custom_call.1} parent=1 // pred_check
      _
    $region3: #{tpu_custom_call.1} parent=1 // pred_check_branch
      %12 = sbr.rel (0) target = $region5
    $region4: #{tpu_custom_call.1} parent=1 // pred_region
      %s14 = ssub.s32 128, 128
      %15 = vsyncadd [#allocation3], %s14
      %s17 = sshll.u32 [#allocation2], 4
      %s18 = int_to_ptr.vmem [resolvable:$true] %s17
      %20 = dma.hbm_to_vmem [thread:$0]  %s0, 128, %s18, [#allocation3]
    $region5: #{tpu_custom_call.1} parent=1 // pred_fallthru
      _
    // Predicated region
    $region6: #{tpu_custom_call.1} parent=1 // pred_check
      _
    $region7: #{tpu_custom_call.1} parent=1 // pred_check_branch
      %22 = sbr.rel (0) target = $region9
    $region8: #{tpu_custom_call.1} parent=1 // pred_region
      %s24 = ssub.s32 1024, 1024
      %25 = vsyncadd [#allocation5], %s24
      %s26 = sshll.u32 [#allocation4], 4
      %s27 = int_to_ptr.vmem [resolvable:$true] %s26
      %32 = dma.hbm_to_vmem [thread:$0]  %s1, 1024, %s27, [#allocation5], 128, 128, 8
    $region9: #{tpu_custom_call.1} parent=1 // pred_fallthru
      _
    // Predicated region
    $region10: #{tpu_custom_call.1} parent=1 // pred_check
      _
    $region11: #{tpu_custom_call.1} parent=1 // pred_check_branch
      %34 = sbr.rel (0) target = $region13
    $region12: #{tpu_custom_call.1} parent=1 // pred_region
      %s36 = ssub.s32 1536, 1536
      %37 = vsyncadd [#allocation5], %s36
      %s38 = sshll.u32 [#allocation6], 4
      %s39 = int_to_ptr.vmem [resolvable:$true] %s38
      %44 = dma.hbm_to_vmem [thread:$0]  %s2, 1536, %s39, [#allocation5], 128, 128, 8
    $region13: #{tpu_custom_call.1} parent=1 // pred_fallthru
      _
    // Predicated region
    $region14: #{tpu_custom_call.1} parent=1 // pred_check
      _
    $region15: #{tpu_custom_call.1} parent=1 // pred_check_branch
      %46 = sbr.rel (0) target = $region17
    $region16: #{tpu_custom_call.1} parent=1 // pred_region
      _
    $region17: #{tpu_custom_call.1} parent=1 // pred_fallthru
      _
    // Predicated region
    $region18: #{tpu_custom_call.1} parent=1 // pred_check
      _
    $region19: #{tpu_custom_call.1} parent=1 // pred_check_branch
      %48 = sbr.rel (0) target = $region21
    $region20: #{tpu_custom_call.1} parent=1 // pred_region
      %49 = dma.done [#allocation3], 128
    $region21: #{tpu_custom_call.1} parent=1 // pred_fallthru
      _
    // Predicated region
    $region22: #{tpu_custom_call.1} parent=1 // pred_check
      _
    $region23: #{tpu_custom_call.1} parent=1 // pred_check_branch
      %51 = sbr.rel (0) target = $region25
    $region24: #{tpu_custom_call.1} parent=1 // pred_region
      %52 = dma.done [#allocation5], 1024
    $region25: #{tpu_custom_call.1} parent=1 // pred_fallthru
      _
    // Predicated region
    $region26: #{tpu_custom_call.1} parent=1 // pred_check
      _
    $region27: #{tpu_custom_call.1} parent=1 // pred_check_branch
      %54 = sbr.rel (0) target = $region29
    $region28: #{tpu_custom_call.1} parent=1 // pred_region
      %55 = dma.done [#allocation5], 1536
    $region29: #{tpu_custom_call.1} parent=1 // pred_fallthru
      _
    %v56 = vld [vmem:[#allocation2] sm:$0xff]
    %v57 = vld [vmem:[#allocation4] sm:$0xff]
    %v58 = vld [vmem:[#allocation4 + $0x8] sm:$0xff]
    %v59 = vld [vmem:[#allocation4 + $0x10] sm:$0xff]
    %v60 = vld [vmem:[#allocation4 + $0x18] sm:$0xff]
    %v61 = vld [vmem:[#allocation4 + $0x20] sm:$0xff]
    %v62 = vld [vmem:[#allocation4 + $0x28] sm:$0xff]
    %v63 = vld [vmem:[#allocation4 + $0x30] sm:$0xff]
    %v64 = vld [vmem:[#allocation4 + $0x38] sm:$0xff]
    %vm65 = vcmask 523264
    %v67 = vsel %vm65, %v56, 0
    %69 = vmatprep.subr.mxu0 0.0
    %70 = vmatpush1.msra.mxu0 0.0
    %71 = vmatprep.subr.mxu0 0.0
    %72 = vmatpush1.msra.mxu0 0.0
    %73 = vmatprep.subr.mxu0 0.0
    %74 = vmatpush1.msra.mxu0 0.0
    %75 = vmatprep.subr.mxu0 0.0
    %76 = vmatpush1.msra.mxu0 0.0
    %77 = vmatprep.subr.mxu0 0.0
    %78 = vmatpush1.msra.mxu0 0.0
    %79 = vmatprep.subr.mxu0 0.0
    %80 = vmatpush1.msra.mxu0 0.0
    %81 = vmatprep.subr.mxu0 0.0
    %82 = vmatpush1.msra.mxu0 0.0
    %83 = vmatprep.subr.mxu0 0.0
    %84 = vmatpush1.msra.mxu0 0.0
    %85 = vmatprep.subr.mxu0 0.0
    %86 = vmatpush1.msra.mxu0 %v64
    %87 = vmatprep.subr.mxu0 0.0
    %88 = vmatpush1.msra.mxu0 %v63
    %89 = vmatprep.subr.mxu0 0.0
    %90 = vmatpush1.msra.mxu0 %v62
    %91 = vmatprep.subr.mxu0 0.0
    %92 = vmatpush1.msra.mxu0 %v61
    %93 = vmatprep.subr.mxu0 0.0
    %94 = vmatpush1.msra.mxu0 %v60
    %95 = vmatprep.subr.mxu0 0.0
    %96 = vmatpush1.msra.mxu0 %v59
    %97 = vmatprep.subr.mxu0 0.0
    %98 = vmatpush1.msra.mxu0 %v58
    %99 = vmatprep.subr.mxu0 0.0
    %100 = vmatpush1.msra.mxu0 %v57
    %101 = vmatprep.subr.mxu0 0.0
    %102 = vmatpush2.msra.mxu0 0.0
    %103 = vmatprep.subr.mxu0 0.0
    %104 = vmatpush2.msra.mxu0 0.0
    %105 = vmatprep.subr.mxu0 0.0
    %106 = vmatpush2.msra.mxu0 0.0
    %107 = vmatprep.subr.mxu0 0.0
    %108 = vmatpush2.msra.mxu0 0.0
    %109 = vmatprep.subr.mxu0 0.0
    %110 = vmatpush2.msra.mxu0 0.0
    %111 = vmatprep.subr.mxu0 0.0
    %112 = vmatpush2.msra.mxu0 0.0
    %113 = vmatprep.subr.mxu0 0.0
    %114 = vmatpush2.msra.mxu0 0.0
    %115 = vmatprep.subr.mxu0 0.0
    %116 = vmatpush2.msra.mxu0 0.0
    %117 = vmatprep.subr.mxu0 0.0
    %118 = vmatpush2.msra.mxu0 0.0
    %119 = vmatprep.subr.mxu0 0.0
    %120 = vmatpush2.msra.mxu0 0.0
    %121 = vmatprep.subr.mxu0 0.0
    %122 = vmatpush2.msra.mxu0 0.0
    %123 = vmatprep.subr.mxu0 0.0
    %124 = vmatpush2.msra.mxu0 0.0
    %125 = vmatprep.subr.mxu0 0.0
    %126 = vmatpush2.msra.mxu0 0.0
    %127 = vmatprep.subr.mxu0 0.0
    %128 = vmatpush2.msra.mxu0 0.0
    %129 = vmatprep.subr.mxu0 0.0
    %130 = vmatpush2.msra.mxu0 0.0
    %131 = vmatprep.subr.mxu0 0.0
    %132 = vmatpush2.msra.mxu0 0.0
    %133 = vmatprep.mubr.f32.mxu0 0.0
    %134 = vmatmul.mubr.f32.gmra.mxu0 %v67
    %v135 = vpop.f32.mrf.mxu0
    %v136 = vadd.f32 0.0, %v135
    %v137 = vpop.f32.mrf.mxu0
    %138 = vdwg.mxu0
    %v139 = vmax.f32 %v136, 0.0
    %v140 = vld [vmem:[#allocation6] sm:$0xff]
    %v141 = vld [vmem:[#allocation6 + $0x8] sm:$0xff]
    %v142 = vld [vmem:[#allocation6 + $0x10] sm:$0xff]
    %v143 = vld [vmem:[#allocation6 + $0x18] sm:$0xff]
    %v144 = vld [vmem:[#allocation6 + $0x20] sm:$0xff]
    %v145 = vld [vmem:[#allocation6 + $0x28] sm:$0xff]
    %v146 = vld [vmem:[#allocation6 + $0x30] sm:$0xff]
    %v147 = vld [vmem:[#allocation6 + $0x38] sm:$0xff]
    %v148 = vld [vmem:[#allocation6 + $0x40] sm:$0xff]
    %v149 = vld [vmem:[#allocation6 + $0x48] sm:$0xff]
    %v150 = vld [vmem:[#allocation6 + $0x50] sm:$0xff]
    %v151 = vld [vmem:[#allocation6 + $0x58] sm:$0xff]
    %v152 = vld [vmem:[%s3] sm:$0x1]
    %v153 = vlaneseq
    %v154 = vshrl.u32 %v153, 7
    %v155 = vsub.s32 0, %v154
    %v156 = vrot.slane %v152, %v155
    %vm157 = vcmask 785408
    %v159 = vsel %vm157, %v139, 0
    %161 = vmatprep.subr.mxu0 0.0
    %162 = vmatpush1.msra.mxu0 0.0
    %163 = vmatprep.subr.mxu0 0.0
    %164 = vmatpush1.msra.mxu0 0.0
    %165 = vmatprep.subr.mxu0 0.0
    %166 = vmatpush1.msra.mxu0 0.0
    %167 = vmatprep.subr.mxu0 0.0
    %168 = vmatpush1.msra.mxu0 0.0
    %169 = vmatprep.subr.mxu0 0.0
    %170 = vmatpush1.msra.mxu0 %v151
    %171 = vmatprep.subr.mxu0 0.0
    %172 = vmatpush1.msra.mxu0 %v150
    %173 = vmatprep.subr.mxu0 0.0
    %174 = vmatpush1.msra.mxu0 %v149
    %175 = vmatprep.subr.mxu0 0.0
    %176 = vmatpush1.msra.mxu0 %v148
    %177 = vmatprep.subr.mxu0 0.0
    %178 = vmatpush1.msra.mxu0 %v147
    %179 = vmatprep.subr.mxu0 0.0
    %180 = vmatpush1.msra.mxu0 %v146
    %181 = vmatprep.subr.mxu0 0.0
    %182 = vmatpush1.msra.mxu0 %v145
    %183 = vmatprep.subr.mxu0 0.0
    %184 = vmatpush1.msra.mxu0 %v144
    %185 = vmatprep.subr.mxu0 0.0
    %186 = vmatpush1.msra.mxu0 %v143
    %187 = vmatprep.subr.mxu0 0.0
    %188 = vmatpush1.msra.mxu0 %v142
    %189 = vmatprep.subr.mxu0 0.0
    %190 = vmatpush1.msra.mxu0 %v141
    %191 = vmatprep.subr.mxu0 0.0
    %192 = vmatpush1.msra.mxu0 %v140
    %193 = vmatprep.subr.mxu0 0.0
    %194 = vmatpush2.msra.mxu0 0.0
    %195 = vmatprep.subr.mxu0 0.0
    %196 = vmatpush2.msra.mxu0 0.0
    %197 = vmatprep.subr.mxu0 0.0
    %198 = vmatpush2.msra.mxu0 0.0
    %199 = vmatprep.subr.mxu0 0.0
    %200 = vmatpush2.msra.mxu0 0.0
    %201 = vmatprep.subr.mxu0 0.0
    %202 = vmatpush2.msra.mxu0 0.0
    %203 = vmatprep.subr.mxu0 0.0
    %204 = vmatpush2.msra.mxu0 0.0
    %205 = vmatprep.subr.mxu0 0.0
    %206 = vmatpush2.msra.mxu0 0.0
    %207 = vmatprep.subr.mxu0 0.0
    %208 = vmatpush2.msra.mxu0 0.0
    %209 = vmatprep.subr.mxu0 0.0
    %210 = vmatpush2.msra.mxu0 0.0
    %211 = vmatprep.subr.mxu0 0.0
    %212 = vmatpush2.msra.mxu0 0.0
    %213 = vmatprep.subr.mxu0 0.0
    %214 = vmatpush2.msra.mxu0 0.0
    %215 = vmatprep.subr.mxu0 0.0
    %216 = vmatpush2.msra.mxu0 0.0
    %217 = vmatprep.subr.mxu0 0.0
    %218 = vmatpush2.msra.mxu0 0.0
    %219 = vmatprep.subr.mxu0 0.0
    %220 = vmatpush2.msra.mxu0 0.0
    %221 = vmatprep.subr.mxu0 0.0
    %222 = vmatpush2.msra.mxu0 0.0
    %223 = vmatprep.subr.mxu0 0.0
    %224 = vmatpush2.msra.mxu0 0.0
    %225 = vmatprep.mubr.f32.mxu0 0.0
    %226 = vmatmul.mubr.f32.gmra.mxu0 %v159
    %v227 = vpop.f32.mrf.mxu0
    %v228 = vadd.f32 %v156, %v227
    %v229 = vpop.f32.mrf.mxu0
    %230 = vdwg.mxu0
    %v231 = vmax.f32 %v228, 0.0
    %v232 = vld [vmem:[%s3 + $0x1] sm:$0x1]
    %v233 = vlaneseq
    %v234 = vshrl.u32 %v233, 7
    %v235 = vsub.s32 0, %v234
    %v236 = vrot.slane %v232, %v235
    %v237 = vmul.f32 %v231, %v236
    %238 = vadd.xlane.f32.xlu0 %v237
    %v239 = vpop.xlane.xlu0 %238
    %v240 = vld [vmem:[%s3 + $0x2] sm:$0x1]
    %v241 = vlaneseq
    %v242 = vshrl.u32 %v241, 7
    %v243 = vsub.s32 0, %v242
    %v244 = vrot.slane %v240, %v243
    %v245 = vadd.f32 %v239, %v244
    %vm246 = vcmask 7168
    %247 = vst.msk [vmem:[%s4] sm:$0xff] %vm246, %v245
    // Predicated region
    $region30: #{tpu_custom_call.1} parent=1 // pred_check
      _
    $region31: #{tpu_custom_call.1} parent=1 // pred_check_branch
      %249 = sbr.rel (0) target = $region33
    $region32: #{tpu_custom_call.1} parent=1 // pred_region
      _
    $region33: #{tpu_custom_call.1} parent=1 // pred_fallthru
      _
    // Predicated region
    $region34: #{tpu_custom_call.1} parent=1 // pred_check
      _
    $region35: #{tpu_custom_call.1} parent=1 // pred_check_branch
      %251 = sbr.rel (0) target = $region37
    $region36: #{tpu_custom_call.1} parent=1 // pred_region
      _
    $region37: #{tpu_custom_call.1} parent=1 // pred_fallthru
      _
    %252 = vsyncpa [#allocation3], 1
    %253 = vsyncpa [#allocation5], 1

</llo_original>
